<compile_context>
chip_gen: v7x
topology: tpu7x:2x2x1
jax: 0.10.0
libtpu: 0.0.40
codegen_flags: <defaults>
</compile_context>

<pallas_src>
import functools

import numpy as np

import jax
import jax.numpy as jnp
from jax.experimental import pallas as pl
from jax.experimental.pallas import tpu as pltpu


_VMEM_LIMIT_BYTES = 48 * 1024 * 1024   # <= v7x's 64 MiB/TC, >> v5e's 16 MiB default
_VMEM_BUDGET_BYTES = 40 * 1024 * 1024  # what the tile plan is sized against
_MAX_BLOCK_BYTES = 4 * 1024 * 1024     # per-block target (~86% of HBM roofline)


def _erosion_kernel(x_ref, w_ref, m_ref, o_ref, *, K_h, K_w, W, HW):
    """x_ref: (R_t, H*W)  input rows (one row = one (b, c) image, lane-dense)
       w_ref: (R_t, K)    per-row (= per-channel) tap offsets
       m_ref: (K, H*W)    {1, 0} validity mask per tap (0 -> zero padding)
       o_ref: (R_t, H*W)  eroded output rows
    """
    ph, pw = K_h // 2, K_w // 2
    x = x_ref[...]                       # compute dtype == block dtype (no f32 up-cast)
    w = w_ref[...]

    def tap_shift(i):
        # PyTorch _se_to_mask quirk: row AND col index both derive from se_h.
        return i // K_h - ph, i % K_h - pw

    # Center tap first: it is unshifted and never masked, so it initializes the
    # accumulator with a single add (one fewer select per element on the VPU).
    order = sorted(range(K_h * K_w), key=lambda i: tap_shift(i) != (0, 0))

    acc = None
    for i in order:
        off = w[:, i:i + 1]              # (R_t, 1): lane-broadcast offset
        sy, sx = tap_shift(i)
        if sy == 0 and sx == 0:
            tap = x + off
        else:
            # tap[p] = x_flat[p + sy*W + sx] where the source lies inside the
            # image, else 0 (zero padding).  One XLU lane roll + one select;
            # the mask also kills the roll's wrap-around artifacts.
            amt = (-(sy * W + sx)) % HW          # pltpu.roll == np.roll(x, amt)
            shifted = pltpu.roll(x, amt, 1) if amt else x
            m = m_ref[i:i + 1, :]                # (1, HW): sublane-broadcast
            tap = jnp.where(m != 0, shifted, 0.0) + off
        acc = tap if acc is None else jnp.minimum(acc, tap)

    o_ref[...] = acc.astype(o_ref.dtype)


def _build_tap_masks(H, W, Kh, Kw, dtype):
    """(Kh*Kw, H*W) {1,0}: 1 where tap i reads inside the image (else zero pad)."""
    ph, pw = Kh // 2, Kw // 2
    rows = np.arange(H)[:, None]
    cols = np.arange(W)[None, :]
    masks = np.zeros((Kh * Kw, H, W), np.float32)
    for i in range(Kh * Kw):
        sy = i // Kh - ph
        sx = i % Kh - pw
        valid = ((rows + sy >= 0) & (rows + sy < H) &
                 (cols + sx >= 0) & (cols + sx < W))
        masks[i] = valid.astype(np.float32)
    return jnp.asarray(masks.reshape(Kh * Kw, H * W), dtype=dtype)


def _pick_row_tile(R, row_bytes, itemsize, mask_bytes):
    # Sublane multiple of the compute dtype (packed rows for sub-32-bit types).
    sub = {1: 32, 2: 16, 4: 8}.get(itemsize, 8)
    if R <= sub:
        return R                                  # single full-extent block (legal)
    # Budget: 2 in + 2 out double-buffered blocks + ~5 block-sized elementwise
    # intermediates + 2x the resident mask must fit _VMEM_BUDGET_BYTES (sized
    # for v7x's 64 MiB/TC; roomy on v5e/v6e's 128 MiB).
    per_block = max(1, (_VMEM_BUDGET_BYTES - 2 * mask_bytes) // 9)
    target = min(_MAX_BLOCK_BYTES, per_block)
    budget_rows = max(sub, target // max(row_bytes, 1))
    cands = [d for d in range(sub, R + 1, sub) if R % d == 0 and d <= budget_rows]
    if not cands:
        # No aligned divisor fits: take the minimum aligned tile; Pallas masks
        # the partial tail block if it does not divide R.
        # TODO(synk): very large H*W (row_bytes >> target) would need H-tiling
        # with a halo to go below one image row per block.
        return sub
    two_points = [d for d in cands if R // d >= 2]   # keep both v7x TCs busy
    return (two_points or cands)[-1]


def depthwise_erosion(x, kernel, kernel_size=(3, 3)):
    """x: (B, C, H, W); kernel: (1, C, Kh*Kw, 1, 1).  Returns (B, C, H, W)."""
    B, C, H, W = x.shape
    Kh, Kw = kernel_size
    K = Kh * Kw
    HW = H * W
    R = B * C

    # Compute dtype: keep bf16 in bf16 (the ~25 VALU ops/elem are the binding
    # slot on v6e/v7x and bf16 doubles elements/op); everything else runs f32.
    cdtype = jnp.bfloat16 if x.dtype == jnp.bfloat16 else jnp.float32
    itemsize = jnp.dtype(cdtype).itemsize

    # Free, layout-preserving fold of contiguous NCHW: rows=(b,c), lanes=h*W+w.
    x2 = x.reshape(R, HW).astype(cdtype)
    # Per-row (= per-channel) tap offsets, broadcast over the batch (tiny).
    w2 = jnp.broadcast_to(kernel.reshape(C, K)[None], (B, C, K))
    w2 = w2.reshape(R, K).astype(cdtype)
    masks = _build_tap_masks(H, W, Kh, Kw, cdtype)          # (K, HW)

    row_bytes = HW * itemsize
    mask_bytes = K * HW * itemsize
    R_tile = _pick_row_tile(R, row_bytes, itemsize, mask_bytes)
    grid = (pl.cdiv(R, R_tile),)

    body = functools.partial(_erosion_kernel, K_h=Kh, K_w=Kw, W=W, HW=HW)

    out = pl.pallas_call(
        body,
        out_shape=jax.ShapeDtypeStruct((R, HW), cdtype),
        grid=grid,
        in_specs=[
            pl.BlockSpec((R_tile, HW), lambda r: (r, 0)),
            pl.BlockSpec((R_tile, K), lambda r: (r, 0)),
            pl.BlockSpec((K, HW), lambda r: (0, 0)),
        ],
        out_specs=pl.BlockSpec((R_tile, HW), lambda r: (r, 0)),
        compiler_params=pltpu.CompilerParams(
            dimension_semantics=("parallel",),
            vmem_limit_bytes=_VMEM_LIMIT_BYTES,
        ),
    )(x2, w2, masks)

    return out.reshape(B, C, H, W)


def _reference(x, kernel, kernel_size=(3, 3)):
    """Pure-JAX reference mirroring the PyTorch forward exactly."""
    B, C, H, W = x.shape
    Kh, Kw = kernel_size
    ph, pw = Kh // 2, Kw // 2
    xpad = jnp.pad(x, ((0, 0), (0, 0), (ph, ph), (pw, pw)))
    taps = []
    for i in range(Kh * Kw):
        dy, dx = i // Kh, i % Kh
        taps.append(xpad[:, :, dy:dy + H, dx:dx + W])
    N = jnp.stack(taps, axis=2)            # (B, C, Kh*Kw, H, W)
    return jnp.min(N + kernel, axis=2)     # (B, C, H, W)


if __name__ == "__main__":
    B, C, H, W = 2, 4, 16, 16
    Kh, Kw = 3, 3

    key = jax.random.PRNGKey(0)
    k_x, k_w = jax.random.split(key)

    x = jax.random.normal(k_x, (B, C, H, W), dtype=jnp.float32)
    # Matches torch.rand(1, C, Kh*Kw, 1, 1) - 1.0 shape/range.
    kernel = jax.random.uniform(k_w, (1, C, Kh * Kw, 1, 1),
                                dtype=jnp.float32) - 1.0

    out = depthwise_erosion(x, kernel, (Kh, Kw))
    out = jax.block_until_ready(out)

    ref = _reference(x, kernel, (Kh, Kw))
    assert out.shape == (B, C, H, W)
    assert jnp.allclose(out, ref, atol=1e-5, rtol=1e-5), "mismatch vs reference"

    print("KERNEL_OK")
</pallas_src>

<mosaic_0001>
module attributes {stable_mosaic.version = 11 : i64} {
  func.func @_erosion_kernel(%arg0: i32, %arg1: memref<8x256xf32, #tpu.memory_space<vmem>>, %arg2: memref<8x9xf32, #tpu.memory_space<vmem>>, %arg3: memref<9x256xf32, #tpu.memory_space<vmem>>, %arg4: memref<8x256xf32, #tpu.memory_space<vmem>>) attributes {dimension_semantics = [#tpu.dimension_semantics<parallel>], iteration_bounds = array<i64: 1>, scalar_prefetch = 0 : i64, scratch_operands = 0 : i64, tpu.core_type = #tpu.core_type<tc>, window_params = [{transform_indices = @transform_0, window_bounds = array<i64: 8, 256>}, {transform_indices = @transform_1, window_bounds = array<i64: 8, 9>}, {pipeline_mode = #tpu.pipeline_mode<synchronous>, transform_indices = @transform_2, window_bounds = array<i64: 9, 256>}, {transform_indices = @transform_3, window_bounds = array<i64: 8, 256>}]} {
    %c0 = arith.constant 0 : index
    %c0_0 = arith.constant 0 : index
    %0 = vector.load %arg1[%c0, %c0_0] : memref<8x256xf32, #tpu.memory_space<vmem>>, vector<8x256xf32>
    %c0_1 = arith.constant 0 : index
    %c0_2 = arith.constant 0 : index
    %1 = vector.load %arg2[%c0_1, %c0_2] : memref<8x9xf32, #tpu.memory_space<vmem>>, vector<8x9xf32>
    %2 = vector.extract_strided_slice %1 {offsets = [0, 4], sizes = [8, 1], strides = [1, 1]} : vector<8x9xf32> to vector<8x1xf32>
    %3 = vector.broadcast %2 : vector<8x1xf32> to vector<8x256xf32>
    %4 = arith.addf %0, %3 : vector<8x256xf32>
    %5 = vector.extract_strided_slice %1 {offsets = [0, 0], sizes = [8, 1], strides = [1, 1]} : vector<8x9xf32> to vector<8x1xf32>
    %c17_i32 = arith.constant 17 : i32
    %6 = tpu.dynamic_rotate %0 by %c17_i32 dim 1 : vector<8x256xf32>, i32 -> vector<8x256xf32>
    %c0_3 = arith.constant 0 : index
    %c0_4 = arith.constant 0 : index
    %7 = vector.load %arg3[%c0_3, %c0_4] : memref<9x256xf32, #tpu.memory_space<vmem>>, vector<1x256xf32>
    %cst = arith.constant 0.000000e+00 : f32
    %8 = vector.broadcast %cst : f32 to vector<1x256xf32>
    %9 = arith.cmpf one, %7, %8 : vector<1x256xf32>
    %cst_5 = arith.constant 0.000000e+00 : f32
    %10 = vector.shape_cast %9 : vector<1x256xi1> to vector<1x256xi1>
    %11 = vector.broadcast %10 : vector<1x256xi1> to vector<8x256xi1>
    %12 = vector.broadcast %cst_5 : f32 to vector<8x256xf32>
    %13 = arith.select %11, %6, %12 : vector<8x256xi1>, vector<8x256xf32>
    %14 = vector.broadcast %5 : vector<8x1xf32> to vector<8x256xf32>
    %15 = arith.addf %13, %14 : vector<8x256xf32>
    %16 = arith.minimumf %4, %15 : vector<8x256xf32>
    %17 = vector.extract_strided_slice %1 {offsets = [0, 1], sizes = [8, 1], strides = [1, 1]} : vector<8x9xf32> to vector<8x1xf32>
    %c16_i32 = arith.constant 16 : i32
    %18 = tpu.dynamic_rotate %0 by %c16_i32 dim 1 : vector<8x256xf32>, i32 -> vector<8x256xf32>
    %c1 = arith.constant 1 : index
    %c0_6 = arith.constant 0 : index
    %19 = vector.load %arg3[%c1, %c0_6] : memref<9x256xf32, #tpu.memory_space<vmem>>, vector<1x256xf32>
    %cst_7 = arith.constant 0.000000e+00 : f32
    %20 = vector.broadcast %cst_7 : f32 to vector<1x256xf32>
    %21 = arith.cmpf one, %19, %20 : vector<1x256xf32>
    %cst_8 = arith.constant 0.000000e+00 : f32
    %22 = vector.shape_cast %21 : vector<1x256xi1> to vector<1x256xi1>
    %23 = vector.broadcast %22 : vector<1x256xi1> to vector<8x256xi1>
    %24 = vector.broadcast %cst_8 : f32 to vector<8x256xf32>
    %25 = arith.select %23, %18, %24 : vector<8x256xi1>, vector<8x256xf32>
    %26 = vector.broadcast %17 : vector<8x1xf32> to vector<8x256xf32>
    %27 = arith.addf %25, %26 : vector<8x256xf32>
    %28 = arith.minimumf %16, %27 : vector<8x256xf32>
    %29 = vector.extract_strided_slice %1 {offsets = [0, 2], sizes = [8, 1], strides = [1, 1]} : vector<8x9xf32> to vector<8x1xf32>
    %c15_i32 = arith.constant 15 : i32
    %30 = tpu.dynamic_rotate %0 by %c15_i32 dim 1 : vector<8x256xf32>, i32 -> vector<8x256xf32>
    %c2 = arith.constant 2 : index
    %c0_9 = arith.constant 0 : index
    %31 = vector.load %arg3[%c2, %c0_9] : memref<9x256xf32, #tpu.memory_space<vmem>>, vector<1x256xf32>
    %cst_10 = arith.constant 0.000000e+00 : f32
    %32 = vector.broadcast %cst_10 : f32 to vector<1x256xf32>
    %33 = arith.cmpf one, %31, %32 : vector<1x256xf32>
    %cst_11 = arith.constant 0.000000e+00 : f32
    %34 = vector.shape_cast %33 : vector<1x256xi1> to vector<1x256xi1>
    %35 = vector.broadcast %34 : vector<1x256xi1> to vector<8x256xi1>
    %36 = vector.broadcast %cst_11 : f32 to vector<8x256xf32>
    %37 = arith.select %35, %30, %36 : vector<8x256xi1>, vector<8x256xf32>
    %38 = vector.broadcast %29 : vector<8x1xf32> to vector<8x256xf32>
    %39 = arith.addf %37, %38 : vector<8x256xf32>
    %40 = arith.minimumf %28, %39 : vector<8x256xf32>
    %41 = vector.extract_strided_slice %1 {offsets = [0, 3], sizes = [8, 1], strides = [1, 1]} : vector<8x9xf32> to vector<8x1xf32>
    %c1_i32 = arith.constant 1 : i32
    %42 = tpu.dynamic_rotate %0 by %c1_i32 dim 1 : vector<8x256xf32>, i32 -> vector<8x256xf32>
    %c3 = arith.constant 3 : index
    %c0_12 = arith.constant 0 : index
    %43 = vector.load %arg3[%c3, %c0_12] : memref<9x256xf32, #tpu.memory_space<vmem>>, vector<1x256xf32>
    %cst_13 = arith.constant 0.000000e+00 : f32
    %44 = vector.broadcast %cst_13 : f32 to vector<1x256xf32>
    %45 = arith.cmpf one, %43, %44 : vector<1x256xf32>
    %cst_14 = arith.constant 0.000000e+00 : f32
    %46 = vector.shape_cast %45 : vector<1x256xi1> to vector<1x256xi1>
    %47 = vector.broadcast %46 : vector<1x256xi1> to vector<8x256xi1>
    %48 = vector.broadcast %cst_14 : f32 to vector<8x256xf32>
    %49 = arith.select %47, %42, %48 : vector<8x256xi1>, vector<8x256xf32>
    %50 = vector.broadcast %41 : vector<8x1xf32> to vector<8x256xf32>
    %51 = arith.addf %49, %50 : vector<8x256xf32>
    %52 = arith.minimumf %40, %51 : vector<8x256xf32>
    %53 = vector.extract_strided_slice %1 {offsets = [0, 5], sizes = [8, 1], strides = [1, 1]} : vector<8x9xf32> to vector<8x1xf32>
    %c255_i32 = arith.constant 255 : i32
    %54 = tpu.dynamic_rotate %0 by %c255_i32 dim 1 : vector<8x256xf32>, i32 -> vector<8x256xf32>
    %c5 = arith.constant 5 : index
    %c0_15 = arith.constant 0 : index
    %55 = vector.load %arg3[%c5, %c0_15] : memref<9x256xf32, #tpu.memory_space<vmem>>, vector<1x256xf32>
    %cst_16 = arith.constant 0.000000e+00 : f32
    %56 = vector.broadcast %cst_16 : f32 to vector<1x256xf32>
    %57 = arith.cmpf one, %55, %56 : vector<1x256xf32>
    %cst_17 = arith.constant 0.000000e+00 : f32
    %58 = vector.shape_cast %57 : vector<1x256xi1> to vector<1x256xi1>
    %59 = vector.broadcast %58 : vector<1x256xi1> to vector<8x256xi1>
    %60 = vector.broadcast %cst_17 : f32 to vector<8x256xf32>
    %61 = arith.select %59, %54, %60 : vector<8x256xi1>, vector<8x256xf32>
    %62 = vector.broadcast %53 : vector<8x1xf32> to vector<8x256xf32>
    %63 = arith.addf %61, %62 : vector<8x256xf32>
    %64 = arith.minimumf %52, %63 : vector<8x256xf32>
    %65 = vector.extract_strided_slice %1 {offsets = [0, 6], sizes = [8, 1], strides = [1, 1]} : vector<8x9xf32> to vector<8x1xf32>
    %c241_i32 = arith.constant 241 : i32
    %66 = tpu.dynamic_rotate %0 by %c241_i32 dim 1 : vector<8x256xf32>, i32 -> vector<8x256xf32>
    %c6 = arith.constant 6 : index
    %c0_18 = arith.constant 0 : index
    %67 = vector.load %arg3[%c6, %c0_18] : memref<9x256xf32, #tpu.memory_space<vmem>>, vector<1x256xf32>
    %cst_19 = arith.constant 0.000000e+00 : f32
    %68 = vector.broadcast %cst_19 : f32 to vector<1x256xf32>
    %69 = arith.cmpf one, %67, %68 : vector<1x256xf32>
    %cst_20 = arith.constant 0.000000e+00 : f32
    %70 = vector.shape_cast %69 : vector<1x256xi1> to vector<1x256xi1>
    %71 = vector.broadcast %70 : vector<1x256xi1> to vector<8x256xi1>
    %72 = vector.broadcast %cst_20 : f32 to vector<8x256xf32>
    %73 = arith.select %71, %66, %72 : vector<8x256xi1>, vector<8x256xf32>
    %74 = vector.broadcast %65 : vector<8x1xf32> to vector<8x256xf32>
    %75 = arith.addf %73, %74 : vector<8x256xf32>
    %76 = arith.minimumf %64, %75 : vector<8x256xf32>
    %77 = vector.extract_strided_slice %1 {offsets = [0, 7], sizes = [8, 1], strides = [1, 1]} : vector<8x9xf32> to vector<8x1xf32>
    %c240_i32 = arith.constant 240 : i32
    %78 = tpu.dynamic_rotate %0 by %c240_i32 dim 1 : vector<8x256xf32>, i32 -> vector<8x256xf32>
    %c7 = arith.constant 7 : index
    %c0_21 = arith.constant 0 : index
    %79 = vector.load %arg3[%c7, %c0_21] : memref<9x256xf32, #tpu.memory_space<vmem>>, vector<1x256xf32>
    %cst_22 = arith.constant 0.000000e+00 : f32
    %80 = vector.broadcast %cst_22 : f32 to vector<1x256xf32>
    %81 = arith.cmpf one, %79, %80 : vector<1x256xf32>
    %cst_23 = arith.constant 0.000000e+00 : f32
    %82 = vector.shape_cast %81 : vector<1x256xi1> to vector<1x256xi1>
    %83 = vector.broadcast %82 : vector<1x256xi1> to vector<8x256xi1>
    %84 = vector.broadcast %cst_23 : f32 to vector<8x256xf32>
    %85 = arith.select %83, %78, %84 : vector<8x256xi1>, vector<8x256xf32>
    %86 = vector.broadcast %77 : vector<8x1xf32> to vector<8x256xf32>
    %87 = arith.addf %85, %86 : vector<8x256xf32>
    %88 = arith.minimumf %76, %87 : vector<8x256xf32>
    %89 = vector.extract_strided_slice %1 {offsets = [0, 8], sizes = [8, 1], strides = [1, 1]} : vector<8x9xf32> to vector<8x1xf32>
    %c239_i32 = arith.constant 239 : i32
    %90 = tpu.dynamic_rotate %0 by %c239_i32 dim 1 : vector<8x256xf32>, i32 -> vector<8x256xf32>
    %c8 = arith.constant 8 : index
    %c0_24 = arith.constant 0 : index
    %91 = vector.load %arg3[%c8, %c0_24] : memref<9x256xf32, #tpu.memory_space<vmem>>, vector<1x256xf32>
    %cst_25 = arith.constant 0.000000e+00 : f32
    %92 = vector.broadcast %cst_25 : f32 to vector<1x256xf32>
    %93 = arith.cmpf one, %91, %92 : vector<1x256xf32>
    %cst_26 = arith.constant 0.000000e+00 : f32
    %94 = vector.shape_cast %93 : vector<1x256xi1> to vector<1x256xi1>
    %95 = vector.broadcast %94 : vector<1x256xi1> to vector<8x256xi1>
    %96 = vector.broadcast %cst_26 : f32 to vector<8x256xf32>
    %97 = arith.select %95, %90, %96 : vector<8x256xi1>, vector<8x256xf32>
    %98 = vector.broadcast %89 : vector<8x1xf32> to vector<8x256xf32>
    %99 = arith.addf %97, %98 : vector<8x256xf32>
    %100 = arith.minimumf %88, %99 : vector<8x256xf32>
    %c0_27 = arith.constant 0 : index
    %c0_28 = arith.constant 0 : index
    %101 = vector.load %arg4[%c0_27, %c0_28] : memref<8x256xf32, #tpu.memory_space<vmem>>, vector<8x256xf32>
    tpu.vector_store %arg4[%c0_27, %c0_28], %100 {strides = array<i32>} : memref<8x256xf32, #tpu.memory_space<vmem>>, vector<8x256xf32>,
    return
  }
  func.func @transform_0(%arg0: i32) -> (i32, i32) {
    %c0_i32 = arith.constant 0 : i32
    %c0_i32_0 = arith.constant 0 : i32
    return %arg0, %c0_i32 : i32, i32
  }
  func.func @transform_1(%arg0: i32) -> (i32, i32) {
    %c0_i32 = arith.constant 0 : i32
    %c0_i32_0 = arith.constant 0 : i32
    return %arg0, %c0_i32 : i32, i32
  }
  func.func @transform_2(%arg0: i32) -> (i32, i32) {
    %c0_i32 = arith.constant 0 : i32
    %c0_i32_0 = arith.constant 0 : i32
    %c0_i32_1 = arith.constant 0 : i32
    return %c0_i32, %c0_i32_0 : i32, i32
  }
  func.func @transform_3(%arg0: i32) -> (i32, i32) {
    %c0_i32 = arith.constant 0 : i32
    %c0_i32_0 = arith.constant 0 : i32
    return %arg0, %c0_i32 : i32, i32
  }
}

</mosaic_0001>

<llo_original>
// kernel: tpu_custom_call.1
$region0: #{tpu_custom_call.1}
  #allocation0 [shape = 'u32[]', space=smem, size = 0x4, offset = 0x4, fixed_abs, tag = 'smem constant byte address 0x4 - core index']
  #allocation1 [shape = 'u32[144,128]{1,0:T(1,128)}', space=vmem, size = 0x12000, scoped, tag = 'internal scratch']
  %s0 = inlined_call_operand.hbm [shape: f32[8,256], index: 0, kind: input, shape index: {}]
  %s1 = inlined_call_operand.hbm [shape: f32[8,9], index: 1, kind: input, shape index: {}]
  %s2 = inlined_call_operand.hbm [shape: f32[9,256], index: 2, kind: input, shape index: {}]
  %s3 = inlined_call_operand.hbm [shape: f32[8,256], index: 3, kind: output, shape index: {}]
  %s4 = sld [smem:[#allocation0]]
  $region34: #{tpu_custom_call.1} parent=0
    _
  %s6 = ssub.s32 1, %s4
  %s7 = scalar_select 0, %s6, %s4
  $region1: #{tpu_custom_call.1} parent=0
    #allocation2 [shape = 'u8[8192]{0}', space=vmem, size = 0x2000, scoped, tag = 'input window, operand 0, single buffered']
    #allocation3 [shape = 's32[1]{0}', space=sflag, size = 0x4, scoped, tag = 'scoped memory for tpu_custom_call.1']
    #allocation4 [shape = 's32[1]{0}', space=sflag, size = 0x4, scoped, tag = 'scoped memory for tpu_custom_call.1']
    #allocation5 [shape = 'u8[4096]{0}', space=vmem, size = 0x1000, scoped, tag = 'input window, operand 1, single buffered']
    #allocation6 [shape = 's32[1]{0}', space=sflag, size = 0x4, scoped, tag = 'scoped memory for tpu_custom_call.1']
    #allocation7 [shape = 'u8[16384]{0}', space=vmem, size = 0x4000, scoped, tag = 'input window, operand 2, single buffered']
    #allocation8 [shape = 'u8[8192]{0}', space=vmem, size = 0x2000, scoped, tag = 'output window, operand 0, single buffered']
    %8 = vsyncpa [#allocation3], 0
    %9 = vsyncpa [#allocation6], 0
    %10 = vsyncpa [#allocation4], 0
    // Predicated region
    $region2: #{tpu_custom_call.1} parent=1 // pred_check
      _
    $region3: #{tpu_custom_call.1} parent=1 // pred_check_branch
      %12 = sbr.rel (0) target = $region5
    $region4: #{tpu_custom_call.1} parent=1 // pred_region
      %s14 = ssub.s32 256, 256
      %15 = vsyncadd [#allocation3], %s14
      %s17 = sshll.u32 [#allocation2], 4
      %s18 = int_to_ptr.vmem [resolvable:$true] %s17
      %20 = dma.hbm_to_vmem [thread:$0]  %s0, 256, %s18, [#allocation3]
    $region5: #{tpu_custom_call.1} parent=1 // pred_fallthru
      _
    // Predicated region
    $region6: #{tpu_custom_call.1} parent=1 // pred_check
      _
    $region7: #{tpu_custom_call.1} parent=1 // pred_check_branch
      %22 = sbr.rel (0) target = $region9
    $region8: #{tpu_custom_call.1} parent=1 // pred_region
      %s24 = ssub.s32 128, 128
      %25 = vsyncadd [#allocation6], %s24
      %s27 = sshll.u32 [#allocation5], 4
      %s28 = int_to_ptr.vmem [resolvable:$true] %s27
      %30 = dma.hbm_to_vmem [thread:$0]  %s1, 128, %s28, [#allocation6]
    $region9: #{tpu_custom_call.1} parent=1 // pred_fallthru
      _
    // Predicated region
    $region10: #{tpu_custom_call.1} parent=1 // pred_check
      _
    $region11: #{tpu_custom_call.1} parent=1 // pred_check_branch
      %32 = sbr.rel (0) target = $region13
    $region12: #{tpu_custom_call.1} parent=1 // pred_region
      %s34 = ssub.s32 512, 512
      %35 = vsyncadd [#allocation6], %s34
      %s36 = sshll.u32 [#allocation7], 4
      %s37 = int_to_ptr.vmem [resolvable:$true] %s36
      %42 = dma.hbm_to_vmem [thread:$0]  %s2, 512, %s37, [#allocation6], 256, 256, 16
    $region13: #{tpu_custom_call.1} parent=1 // pred_fallthru
      _
    // Predicated region
    $region14: #{tpu_custom_call.1} parent=1 // pred_check
      _
    $region15: #{tpu_custom_call.1} parent=1 // pred_check_branch
      %44 = sbr.rel (0) target = $region17
    $region16: #{tpu_custom_call.1} parent=1 // pred_region
      %45 = dma.done [#allocation3], 256
    $region17: #{tpu_custom_call.1} parent=1 // pred_fallthru
      _
    // Predicated region
    $region18: #{tpu_custom_call.1} parent=1 // pred_check
      _
    $region19: #{tpu_custom_call.1} parent=1 // pred_check_branch
      %47 = sbr.rel (0) target = $region21
    $region20: #{tpu_custom_call.1} parent=1 // pred_region
      %48 = dma.done [#allocation6], 128
    $region21: #{tpu_custom_call.1} parent=1 // pred_fallthru
      _
    // Predicated region
    $region22: #{tpu_custom_call.1} parent=1 // pred_check
      _
    $region23: #{tpu_custom_call.1} parent=1 // pred_check_branch
      %50 = sbr.rel (0) target = $region25
    $region24: #{tpu_custom_call.1} parent=1 // pred_region
      %51 = dma.done [#allocation6], 512
    $region25: #{tpu_custom_call.1} parent=1 // pred_fallthru
      _
    %v52 = vld [vmem:[#allocation2] sm:$0xff]
    %v53 = vld [vmem:[#allocation2 + $0x8] sm:$0xff]
    %v54 = vld [vmem:[#allocation5] sm:$0xff]
    %56 = vset.pattern.permute.xlu0 4
    %57 = vperm.xlu0 %56, %v54
    %v58 = vpop.permute.xlu0 %57
    %v60 = vadd.f32 %v52, %v58
    %v61 = vadd.f32 %v53, %v58
    %62 = vrot.lane.b32.xlu0 %v52, 17
    %v63 = vpop.permute.xlu0 %62
    %64 = vrot.lane.b32.xlu0 %v53, 17
    %v65 = vpop.permute.xlu0 %64
    %v66 = vlaneseq
    %v67 = vand.u32 %v66, 127
    %vm68 = vcmp.lt.s32.totalorder %v67, 17
    %v69 = vsel %vm68, %v63, %v65
    %v70 = vsel %vm68, %v65, %v63
    %v71 = vld [vmem:[#allocation7] ss:$8 sm:$0x3]
    %vm72 = vcmp.ne.f32.partialorder %v71, 0.0
    %v73 = vsel %vm72, 1, 0
    %v74 = vlaneseq
    %v75 = vshrl.u32 %v74, 7
    %v76 = vsub.s32 0, %v75
    %v77 = vrot.slane %v73, %v76
    %v78 = vlaneseq
    %v79 = vshrl.u32 %v78, 7
    %v80 = vsub.s32 1, %v79
    %v81 = vrot.slane %v73, %v80
    %vm82 = vcmp.eq.s32.totalorder %v77, 1
    %vm83 = vcmp.eq.s32.totalorder %v81, 1
    %v84 = vsel %vm82, %v70, 0.0
    %v85 = vsel %vm83, %v69, 0.0
    %86 = vset.pattern.permute.xlu0 0
    %87 = vperm.xlu0 %86, %v54
    %v88 = vpop.permute.xlu0 %87
    %v90 = vadd.f32 %v84, %v88
    %v91 = vadd.f32 %v85, %v88
    %v92 = vmin.f32 %v60, %v90
    %v93 = vmin.f32 %v61, %v91
    %94 = vrot.lane.b32.xlu0 %v52, 16
    %v95 = vpop.permute.xlu0 %94
    %96 = vrot.lane.b32.xlu0 %v53, 16
    %v97 = vpop.permute.xlu0 %96
    %vm98 = vcmp.lt.s32.totalorder %v67, 16
    %v99 = vsel %vm98, %v95, %v97
    %v100 = vsel %vm98, %v97, %v95
    %s101 = scalar_lea.vmem [#allocation7], 1
    %v102 = vld [vmem:[%s101] ss:$8 sm:$0x3]
    %vm103 = vcmp.ne.f32.partialorder %v102, 0.0
    %v104 = vsel %vm103, 1, 0
    %v105 = vlaneseq
    %v106 = vshrl.u32 %v105, 7
    %v107 = vsub.s32 0, %v106
    %v108 = vrot.slane %v104, %v107
    %v109 = vlaneseq
    %v110 = vshrl.u32 %v109, 7
    %v111 = vsub.s32 1, %v110
    %v112 = vrot.slane %v104, %v111
    %vm113 = vcmp.eq.s32.totalorder %v108, 1
    %vm114 = vcmp.eq.s32.totalorder %v112, 1
    %v115 = vsel %vm113, %v100, 0.0
    %v116 = vsel %vm114, %v99, 0.0
    %117 = vset.pattern.permute.xlu0 1
    %118 = vperm.xlu0 %117, %v54
    %v119 = vpop.permute.xlu0 %118
    %v121 = vadd.f32 %v115, %v119
    %v122 = vadd.f32 %v116, %v119
    %v123 = vmin.f32 %v92, %v121
    %v124 = vmin.f32 %v93, %v122
    %125 = vrot.lane.b32.xlu0 %v52, 15
    %v126 = vpop.permute.xlu0 %125
    %127 = vrot.lane.b32.xlu0 %v53, 15
    %v128 = vpop.permute.xlu0 %127
    %vm129 = vcmp.lt.s32.totalorder %v67, 15
    %v130 = vsel %vm129, %v126, %v128
    %v131 = vsel %vm129, %v128, %v126
    %s132 = scalar_lea.vmem [#allocation7], 2
    %v133 = vld [vmem:[%s132] ss:$8 sm:$0x3]
    %vm134 = vcmp.ne.f32.partialorder %v133, 0.0
    %v135 = vsel %vm134, 1, 0
    %v136 = vlaneseq
    %v137 = vshrl.u32 %v136, 7
    %v138 = vsub.s32 0, %v137
    %v139 = vrot.slane %v135, %v138
    %v140 = vlaneseq
    %v141 = vshrl.u32 %v140, 7
    %v142 = vsub.s32 1, %v141
    %v143 = vrot.slane %v135, %v142
    %vm144 = vcmp.eq.s32.totalorder %v139, 1
    %vm145 = vcmp.eq.s32.totalorder %v143, 1
    %v146 = vsel %vm144, %v131, 0.0
    %v147 = vsel %vm145, %v130, 0.0
    %148 = vset.pattern.permute.xlu0 2
    %149 = vperm.xlu0 %148, %v54
    %v150 = vpop.permute.xlu0 %149
    %v152 = vadd.f32 %v146, %v150
    %v153 = vadd.f32 %v147, %v150
    %v154 = vmin.f32 %v123, %v152
    %v155 = vmin.f32 %v124, %v153
    %156 = vrot.lane.b32.xlu0 %v52, 1
    %v157 = vpop.permute.xlu0 %156
    %158 = vrot.lane.b32.xlu0 %v53, 1
    %v159 = vpop.permute.xlu0 %158
    %vm160 = vcmp.lt.s32.totalorder %v67, 1
    %v161 = vsel %vm160, %v157, %v159
    %v162 = vsel %vm160, %v159, %v157
    %s163 = scalar_lea.vmem [#allocation7], 3
    %v164 = vld [vmem:[%s163] ss:$8 sm:$0x3]
    %vm165 = vcmp.ne.f32.partialorder %v164, 0.0
    %v166 = vsel %vm165, 1, 0
    %v167 = vlaneseq
    %v168 = vshrl.u32 %v167, 7
    %v169 = vsub.s32 0, %v168
    %v170 = vrot.slane %v166, %v169
    %v171 = vlaneseq
    %v172 = vshrl.u32 %v171, 7
    %v173 = vsub.s32 1, %v172
    %v174 = vrot.slane %v166, %v173
    %vm175 = vcmp.eq.s32.totalorder %v170, 1
    %vm176 = vcmp.eq.s32.totalorder %v174, 1
    %v177 = vsel %vm175, %v162, 0.0
    %v178 = vsel %vm176, %v161, 0.0
    %179 = vset.pattern.permute.xlu0 3
    %180 = vperm.xlu0 %179, %v54
    %v181 = vpop.permute.xlu0 %180
    %v183 = vadd.f32 %v177, %v181
    %v184 = vadd.f32 %v178, %v181
    %v185 = vmin.f32 %v154, %v183
    %v186 = vmin.f32 %v155, %v184
    %187 = vrot.lane.b32.xlu0 %v52, 127
    %v188 = vpop.permute.xlu0 %187
    %189 = vrot.lane.b32.xlu0 %v53, 127
    %v190 = vpop.permute.xlu0 %189
    %vm191 = vcmp.lt.s32.totalorder %v67, 127
    %v192 = vsel %vm191, %v188, %v190
    %v193 = vsel %vm191, %v190, %v188
    %s194 = scalar_lea.vmem [#allocation7], 5
    %v195 = vld [vmem:[%s194] ss:$8 sm:$0x3]
    %vm196 = vcmp.ne.f32.partialorder %v195, 0.0
    %v197 = vsel %vm196, 1, 0
    %v198 = vlaneseq
    %v199 = vshrl.u32 %v198, 7
    %v200 = vsub.s32 0, %v199
    %v201 = vrot.slane %v197, %v200
    %v202 = vlaneseq
    %v203 = vshrl.u32 %v202, 7
    %v204 = vsub.s32 1, %v203
    %v205 = vrot.slane %v197, %v204
    %vm206 = vcmp.eq.s32.totalorder %v201, 1
    %vm207 = vcmp.eq.s32.totalorder %v205, 1
    %v208 = vsel %vm206, %v192, 0.0
    %v209 = vsel %vm207, %v193, 0.0
    %210 = vset.pattern.permute.xlu0 5
    %211 = vperm.xlu0 %210, %v54
    %v212 = vpop.permute.xlu0 %211
    %v214 = vadd.f32 %v208, %v212
    %v215 = vadd.f32 %v209, %v212
    %v216 = vmin.f32 %v185, %v214
    %v217 = vmin.f32 %v186, %v215
    %218 = vrot.lane.b32.xlu0 %v52, 113
    %v219 = vpop.permute.xlu0 %218
    %220 = vrot.lane.b32.xlu0 %v53, 113
    %v221 = vpop.permute.xlu0 %220
    %vm222 = vcmp.lt.s32.totalorder %v67, 113
    %v223 = vsel %vm222, %v219, %v221
    %v224 = vsel %vm222, %v221, %v219
    %s225 = scalar_lea.vmem [#allocation7], 6
    %v226 = vld [vmem:[%s225] ss:$8 sm:$0x3]
    %vm227 = vcmp.ne.f32.partialorder %v226, 0.0
    %v228 = vsel %vm227, 1, 0
    %v229 = vlaneseq
    %v230 = vshrl.u32 %v229, 7
    %v231 = vsub.s32 0, %v230
    %v232 = vrot.slane %v228, %v231
    %v233 = vlaneseq
    %v234 = vshrl.u32 %v233, 7
    %v235 = vsub.s32 1, %v234
    %v236 = vrot.slane %v228, %v235
    %vm237 = vcmp.eq.s32.totalorder %v232, 1
    %vm238 = vcmp.eq.s32.totalorder %v236, 1
    %v239 = vsel %vm237, %v223, 0.0
    %v240 = vsel %vm238, %v224, 0.0
    %241 = vset.pattern.permute.xlu0 6
    %242 = vperm.xlu0 %241, %v54
    %v243 = vpop.permute.xlu0 %242
    %v245 = vadd.f32 %v239, %v243
    %v246 = vadd.f32 %v240, %v243
    %v247 = vmin.f32 %v216, %v245
    %v248 = vmin.f32 %v217, %v246
    %249 = vrot.lane.b32.xlu0 %v52, 112
    %v250 = vpop.permute.xlu0 %249
    %251 = vrot.lane.b32.xlu0 %v53, 112
    %v252 = vpop.permute.xlu0 %251
    %vm253 = vcmp.lt.s32.totalorder %v67, 112
    %v254 = vsel %vm253, %v250, %v252
    %v255 = vsel %vm253, %v252, %v250
    %s256 = scalar_lea.vmem [#allocation7], 7
    %v257 = vld [vmem:[%s256] ss:$8 sm:$0x3]
    %vm258 = vcmp.ne.f32.partialorder %v257, 0.0
    %v259 = vsel %vm258, 1, 0
    %v260 = vlaneseq
    %v261 = vshrl.u32 %v260, 7
    %v262 = vsub.s32 0, %v261
    %v263 = vrot.slane %v259, %v262
    %v264 = vlaneseq
    %v265 = vshrl.u32 %v264, 7
    %v266 = vsub.s32 1, %v265
    %v267 = vrot.slane %v259, %v266
    %vm268 = vcmp.eq.s32.totalorder %v263, 1
    %vm269 = vcmp.eq.s32.totalorder %v267, 1
    %v270 = vsel %vm268, %v254, 0.0
    %v271 = vsel %vm269, %v255, 0.0
    %272 = vset.pattern.permute.xlu0 7
    %273 = vperm.xlu0 %272, %v54
    %v274 = vpop.permute.xlu0 %273
    %v276 = vadd.f32 %v270, %v274
    %v277 = vadd.f32 %v271, %v274
    %v278 = vmin.f32 %v247, %v276
    %v279 = vmin.f32 %v248, %v277
    %280 = vrot.lane.b32.xlu0 %v52, 111
    %v281 = vpop.permute.xlu0 %280
    %282 = vrot.lane.b32.xlu0 %v53, 111
    %v283 = vpop.permute.xlu0 %282
    %vm284 = vcmp.lt.s32.totalorder %v67, 111
    %v285 = vsel %vm284, %v281, %v283
    %v286 = vsel %vm284, %v283, %v281
    %s287 = scalar_lea.vmem [#allocation7], 16
    %v288 = vld [vmem:[%s287] ss:$8 sm:$0x3]
    %vm289 = vcmp.ne.f32.partialorder %v288, 0.0
    %v290 = vsel %vm289, 1, 0
    %v291 = vlaneseq
    %v292 = vshrl.u32 %v291, 7
    %v293 = vsub.s32 0, %v292
    %v294 = vrot.slane %v290, %v293
    %v295 = vlaneseq
    %v296 = vshrl.u32 %v295, 7
    %v297 = vsub.s32 1, %v296
    %v298 = vrot.slane %v290, %v297
    %vm299 = vcmp.eq.s32.totalorder %v294, 1
    %vm300 = vcmp.eq.s32.totalorder %v298, 1
    %v301 = vsel %vm299, %v285, 0.0
    %v302 = vsel %vm300, %v286, 0.0
    %303 = vset.pattern.permute.xlu0 8
    %304 = vperm.xlu0 %303, %v54
    %v305 = vpop.permute.xlu0 %304
    %v307 = vadd.f32 %v301, %v305
    %v308 = vadd.f32 %v302, %v305
    %v309 = vmin.f32 %v278, %v307
    %v310 = vmin.f32 %v279, %v308
    %311 = vst [vmem:[#allocation8] sm:$0xff] %v309
    %312 = vst [vmem:[#allocation8 + $0x8] sm:$0xff] %v310
    // Predicated region
    $region26: #{tpu_custom_call.1} parent=1 // pred_check
      _
    $region27: #{tpu_custom_call.1} parent=1 // pred_check_branch
      %314 = sbr.rel (0) target = $region29
    $region28: #{tpu_custom_call.1} parent=1 // pred_region
      %s316 = ssub.s32 256, 256
      %317 = vsyncadd [#allocation4], %s316
      %s319 = sshll.u32 [#allocation8], 4
      %s320 = int_to_ptr.vmem [resolvable:$true] %s319
      %322 = dma.vmem_to_hbm [thread:$0]  %s320, 256, %s3, [#allocation4]
    $region29: #{tpu_custom_call.1} parent=1 // pred_fallthru
      _
    // Predicated region
    $region30: #{tpu_custom_call.1} parent=1 // pred_check
      _
    $region31: #{tpu_custom_call.1} parent=1 // pred_check_branch
      %324 = sbr.rel (0) target = $region33
    $region32: #{tpu_custom_call.1} parent=1 // pred_region
      %325 = dma.done [#allocation4], 256
    $region33: #{tpu_custom_call.1} parent=1 // pred_fallthru
      _
    %326 = vsyncpa [#allocation3], 1
    %327 = vsyncpa [#allocation6], 1
    %328 = vsyncpa [#allocation4], 1

</llo_original>
